<compile_context>
chip_gen: v7x
topology: tpu7x:2x2x1
jax: 0.10.0
libtpu: 0.0.40
codegen_flags: <defaults>
</compile_context>

<pallas_src>
import functools

import jax
import jax.numpy as jnp
from jax.experimental import pallas as pl
from jax.experimental.pallas import tpu as pltpu


_SUBLANE_BF16 = 16  # bf16 sublane tile: (TB,Np,L)->(TB*Np,L) merge is free iff Np % 16 == 0


# ---------------------------------------------------------------------------
# Kernel
# ---------------------------------------------------------------------------
def amil_kernel(x_ref, wab_ref, bab_ref, wc_ref, bc_ref,
                h_ref, a_ref, awo_ref, *, n_valid, act_dtype):
    TB, Np, L = x_ref.shape
    D = wab_ref.shape[1] // 2

    x = x_ref[...]                                   # (TB, Np, L) bf16
    x2 = x.reshape(TB * Np, L)                       # free merge (Np % 16 == 0)

    # Fused attention_a / attention_b projection: one MXU pass over [Wa | Wb].
    y = jnp.dot(x2, wab_ref[...], preferred_element_type=jnp.float32)
    y = (y + bab_ref[...]).astype(act_dtype)         # bf16 activations on v6e/v7x
    a = jnp.tanh(y[:, :D])
    b = jax.nn.sigmoid(y[:, D:])
    ab = (a * b).astype(jnp.bfloat16)                # (TB*Np, D) MXU operand
    ab3 = ab.reshape(TB, Np, D)                      # free split (Np % 16 == 0)

    # attention_c (Linear(D, 1)) as a batched (1,D)@(D,Np) MXU matvec so the
    # scores come out lane-dense (instances on the lane axis): dense stores,
    # lane-wise softmax, no column-layout relayout.
    wc_b = jnp.broadcast_to(wc_ref[...].reshape(1, 1, D), (TB, 1, D))
    scores = jnp.einsum('bxd,bnd->bxn', wc_b, ab3,
                        preferred_element_type=jnp.float32) + bc_ref[0, 0]
    # scores: (TB, 1, Np) f32

    if n_valid < Np:                                 # mask zero-padded instances
        lane = jax.lax.broadcasted_iota(jnp.int32, (TB, 1, Np), 2)
        masked = jnp.where(lane < n_valid, scores, jnp.float32(-1e30))
    else:
        masked = scores

    # Stable softmax along the lane (instance) axis.
    m = jnp.max(masked, axis=-1, keepdims=True)      # (TB, 1, 1)
    e = jnp.exp(masked - m)                          # (TB, 1, Np)
    s = jnp.sum(e, axis=-1, keepdims=True)           # (TB, 1, 1)
    attn = e * pl.reciprocal(s, approx=True)         # (TB, 1, Np) f32

    # h = A @ x per bag: batched M=1 MXU matmul with f32 accumulation; avoids
    # materializing a (TB, Np, L) weighted-x temporary.
    h = jnp.einsum('bxn,bnl->bxl', attn.astype(jnp.bfloat16), x,
                   preferred_element_type=jnp.float32)

    h_ref[...] = h.astype(h_ref.dtype)               # (TB, 1, L)
    a_ref[...] = attn.astype(a_ref.dtype)            # (TB, 1, Np) lane-dense
    awo_ref[...] = scores.astype(awo_ref.dtype)      # (TB, 1, Np) lane-dense


# ---------------------------------------------------------------------------
# Wrapper helpers
# ---------------------------------------------------------------------------
def _supports_bf16_compute():
    try:
        kind = jax.devices()[0].device_kind.lower()
    except Exception:
        return False
    return any(tag in kind for tag in ("v6", "v7", "7x"))


def _vmem_limit_bytes():
    cap = 64 << 20
    try:
        info = pltpu.get_tpu_info()
        cap = int(getattr(info, "vmem_capacity_bytes", cap) or cap)
    except Exception:
        pass
    # ~96 MiB on 128 MiB parts (v5e/v6e), ~48 MiB on v7x's 64 MiB.
    return int(min(100 << 20, (cap * 3) // 4))


def _pick_tb(B, Np, L, D, budget_bytes):
    """Largest divisor of B whose working set fits the VMEM budget, capped at
    B//2 so the 'parallel' batch axis has >= 2 grid steps (megacore/v7x)."""
    def block_bytes(t):
        x_blk = t * Np * L * 2                 # bf16 x block
        y_blk = t * Np * (2 * D) * 4           # f32 fused projection output
        ab_blk = t * Np * (2 * D) * 2          # act-dtype a, b, a*b
        outs = t * (2 * Np + L) * 4            # lane-dense attn/scores + h
        return 2 * x_blk + y_blk + ab_blk + outs   # 2x: double-buffered x
    cap = B if B == 1 else max(1, B // 2)
    best = 1
    for t in range(1, cap + 1):
        if B % t:
            continue
        if block_bytes(t) > budget_bytes:
            break
        best = t
        if t * Np >= 512 and t * Np * L * 2 >= (2 << 20):
            break                               # block already big enough
    return best


def init_params(key, L, D):
    """Deterministic f32 parameters; Wa/Wb pre-transposed for x @ W, Wc as a row."""
    k = jax.random.split(key, 6)
    wa = jax.random.normal(k[0], (L, D), jnp.float32) * 0.02
    ba = jax.random.normal(k[1], (1, D), jnp.float32) * 0.02
    wb = jax.random.normal(k[2], (L, D), jnp.float32) * 0.02
    bb = jax.random.normal(k[3], (1, D), jnp.float32) * 0.02
    wc = jax.random.normal(k[4], (1, D), jnp.float32) * 0.02   # Linear(D,1).weight
    bc = jax.random.normal(k[5], (1, 1), jnp.float32) * 0.02
    return (wa, ba, wb, bb, wc, bc)


def prepare_params(params):
    """One-time conversion of parameters to the kernel layout/dtypes (fused
    [Wa|Wb] in bf16), done outside the forward so no per-call cast pass."""
    wa, ba, wb, bb, wc, bc = params
    D = wa.shape[1]
    return dict(
        wab=jnp.concatenate([wa, wb], axis=1).astype(jnp.bfloat16),   # (L, 2D)
        bab=jnp.concatenate([ba, bb], axis=1).astype(jnp.float32),    # (1, 2D)
        wc=wc.astype(jnp.bfloat16),                                   # (1, D)
        bc=jnp.asarray(bc, jnp.float32).reshape(1, 1),
        D=D,
        act_dtype=jnp.bfloat16 if _supports_bf16_compute() else jnp.float32,
    )


def amil_forward(x, prep, tb=None):
    """x: (B, N, L) or (N, L). Returns (h, A, A_without_softmax) in float32."""
    if x.ndim == 2:
        x = x[None]                                  # unsqueeze(0)
    B, N, L = x.shape
    D = prep["D"]

    # bf16 activations: the kernel is HBM-bandwidth-bound on the x read.
    # (Ideally the upstream producer already emits bf16 and this cast is free.)
    x = x.astype(jnp.bfloat16)

    # Pad the instance axis to the bf16 sublane tile; padded instances are
    # masked out of the softmax inside the kernel and sliced off below.
    Np = ((N + _SUBLANE_BF16 - 1) // _SUBLANE_BF16) * _SUBLANE_BF16
    if Np != N:
        x = jnp.pad(x, ((0, 0), (0, Np - N), (0, 0)))

    vmem_limit = _vmem_limit_bytes()
    if tb is None:
        tb = _pick_tb(B, Np, L, D, (vmem_limit * 3) // 5)
    else:
        tb = max(1, min(int(tb), B))
        while B % tb:                                # tb must divide B: no
            tb -= 1                                  # batch-padding concatenate

    kernel = functools.partial(amil_kernel, n_valid=N, act_dtype=prep["act_dtype"])

    out_shapes = (
        jax.ShapeDtypeStruct((B, 1, L), jnp.float32),    # h
        jax.ShapeDtypeStruct((B, 1, Np), jnp.float32),   # A (lane-dense)
        jax.ShapeDtypeStruct((B, 1, Np), jnp.float32),   # A_without_softmax
    )

    grid_spec = pltpu.PrefetchScalarGridSpec(
        num_scalar_prefetch=0,
        grid=(B // tb,),
        in_specs=[
            pl.BlockSpec((tb, Np, L), lambda i: (i, 0, 0)),      # x (bf16)
            pl.BlockSpec((L, 2 * D), lambda i: (0, 0)),          # [Wa | Wb] bf16
            pl.BlockSpec((1, 2 * D), lambda i: (0, 0)),          # [ba | bb] f32
            pl.BlockSpec((1, D), lambda i: (0, 0)),              # Wc row bf16
            pl.BlockSpec(memory_space=pltpu.MemorySpace.SMEM),   # bc scalar
        ],
        out_specs=[
            pl.BlockSpec((tb, 1, L), lambda i: (i, 0, 0)),
            pl.BlockSpec((tb, 1, Np), lambda i: (i, 0, 0)),
            pl.BlockSpec((tb, 1, Np), lambda i: (i, 0, 0)),
        ],
    )

    h, attn, scores = pl.pallas_call(
        kernel,
        out_shape=out_shapes,
        grid_spec=grid_spec,
        compiler_params=pltpu.CompilerParams(
            dimension_semantics=("parallel",),
            vmem_limit_bytes=vmem_limit,
        ),
    )(x, prep["wab"], prep["bab"], prep["wc"], prep["bc"])

    # Drop N padding; squeeze the size-1 middle dim (free, outside the kernel).
    return h[:, 0, :], attn[:, 0, :N], scores[:, 0, :N]


def amil_reference(x, params):
    """Pure-JAX f32 reference of the PyTorch forward (inference mode)."""
    if x.ndim == 2:
        x = x[None]
    wa, ba, wb, bb, wc, bc = params
    a = jnp.tanh(x @ wa + ba)
    b = jax.nn.sigmoid(x @ wb + bb)
    s = jnp.sum((a * b) * wc, axis=-1) + bc[0, 0]    # (B, N)
    A = jax.nn.softmax(s, axis=1)
    h = jnp.einsum('bn,bnl->bl', A, x)               # (B, L)
    return h, A, s


if __name__ == "__main__":
    key = jax.random.PRNGKey(0)

    def run_case(kx, kp, B, N, L, D):
        x = jax.random.normal(kx, (B, N, L), jnp.float32)
        params = init_params(kp, L, D)
        prep = prepare_params(params)
        h, A, A_wo = amil_forward(x, prep)
        jax.block_until_ready((h, A, A_wo))
        h_r, A_r, A_wo_r = amil_reference(x, params)
        assert h.shape == h_r.shape and A.shape == A_r.shape and A_wo.shape == A_wo_r.shape
        # bf16 MXU operands / activations + approx reciprocal -> loose tolerance.
        assert jnp.allclose(h, h_r, atol=2e-2, rtol=2e-2), "h mismatch"
        assert jnp.allclose(A, A_r, atol=2e-2, rtol=2e-2), "A mismatch"
        assert jnp.allclose(A_wo, A_wo_r, atol=2e-2, rtol=2e-2), "A_without_softmax mismatch"

    k1, k2, k3, k4 = jax.random.split(key, 4)
    # Aligned case: N multiple of 16; B=4 -> tb=2, grid=(2,) (>= 2 steps for megacore).
    run_case(k1, k2, B=4, N=16, L=32, D=16)
    # Unaligned case: N=12 pads to 16 (masked softmax), B=3 -> tb=1, grid=(3,).
    run_case(k3, k4, B=3, N=12, L=32, D=16)

    print("KERNEL_OK")
</pallas_src>

<mosaic_0001>
module attributes {stable_mosaic.version = 11 : i64} {
  func.func @amil_kernel(%arg0: i32, %arg1: memref<2x16x32xbf16, #tpu.memory_space<vmem>>, %arg2: memref<32x32xbf16, #tpu.memory_space<vmem>>, %arg3: memref<1x32xf32, #tpu.memory_space<vmem>>, %arg4: memref<1x16xbf16, #tpu.memory_space<vmem>>, %arg5: memref<1x1xf32, #tpu.memory_space<smem>>, %arg6: memref<2x1x32xf32, #tpu.memory_space<vmem>>, %arg7: memref<2x1x16xf32, #tpu.memory_space<vmem>>, %arg8: memref<2x1x16xf32, #tpu.memory_space<vmem>>) attributes {dimension_semantics = [#tpu.dimension_semantics<parallel>], iteration_bounds = array<i64: 2>, scalar_prefetch = 0 : i64, scratch_operands = 0 : i64, tpu.core_type = #tpu.core_type<tc>, window_params = [{transform_indices = @transform_0, window_bounds = array<i64: 2, 16, 32>}, {pipeline_mode = #tpu.pipeline_mode<synchronous>, transform_indices = @transform_1, window_bounds = array<i64: 32, 32>}, {pipeline_mode = #tpu.pipeline_mode<synchronous>, transform_indices = @transform_2, window_bounds = array<i64: 1, 32>}, {pipeline_mode = #tpu.pipeline_mode<synchronous>, transform_indices = @transform_3, window_bounds = array<i64: 1, 16>}, {transform_indices = @transform_4, window_bounds = array<i64: 1, 1>}, {transform_indices = @transform_5, window_bounds = array<i64: 2, 1, 32>}, {transform_indices = @transform_6, window_bounds = array<i64: 2, 1, 16>}, {transform_indices = @transform_7, window_bounds = array<i64: 2, 1, 16>}]} {
    %c0 = arith.constant 0 : index
    %c0_0 = arith.constant 0 : index
    %c0_1 = arith.constant 0 : index
    %0 = vector.load %arg1[%c0, %c0_0, %c0_1] : memref<2x16x32xbf16, #tpu.memory_space<vmem>>, vector<2x16x32xbf16>
    %1 = vector.shape_cast %0 : vector<2x16x32xbf16> to vector<32x32xbf16>
    %c0_2 = arith.constant 0 : index
    %c0_3 = arith.constant 0 : index
    %2 = vector.load %arg2[%c0_2, %c0_3] : memref<32x32xbf16, #tpu.memory_space<vmem>>, vector<32x32xbf16>
    %cst = arith.constant dense<0.000000e+00> : vector<32x32xf32>
    %3 = tpu.matmul %1, %2, %cst {dimension_numbers = #tpu.dot_dimension_numbers<[1], [0], [0], [1], [0, 0, 1, 1], [], []>} : vector<32x32xbf16>, vector<32x32xbf16>, vector<32x32xf32> -> vector<32x32xf32>
    %c0_4 = arith.constant 0 : index
    %c0_5 = arith.constant 0 : index
    %4 = vector.load %arg3[%c0_4, %c0_5] : memref<1x32xf32, #tpu.memory_space<vmem>>, vector<1x32xf32>
    %5 = vector.broadcast %4 : vector<1x32xf32> to vector<32x32xf32>
    %6 = arith.addf %3, %5 : vector<32x32xf32>
    %7 = vector.extract_strided_slice %6 {offsets = [0, 0], sizes = [32, 16], strides = [1, 1]} : vector<32x32xf32> to vector<32x16xf32>
    %8 = math.tanh %7 : vector<32x16xf32>
    %9 = vector.extract_strided_slice %6 {offsets = [0, 16], sizes = [32, 16], strides = [1, 1]} : vector<32x32xf32> to vector<32x16xf32>
    %10 = arith.negf %9 : vector<32x16xf32>
    %11 = math.exp %10 : vector<32x16xf32>
    %cst_6 = arith.constant 1.000000e+00 : f32
    %12 = vector.broadcast %cst_6 : f32 to vector<32x16xf32>
    %13 = arith.addf %12, %11 : vector<32x16xf32>
    %14 = arith.divf %12, %13 : vector<32x16xf32>
    %15 = arith.mulf %8, %14 : vector<32x16xf32>
    %16 = arith.truncf %15 : vector<32x16xf32> to vector<32x16xbf16>
    %17 = vector.shape_cast %16 : vector<32x16xbf16> to vector<2x16x16xbf16>
    %c0_7 = arith.constant 0 : index
    %c0_8 = arith.constant 0 : index
    %18 = vector.load %arg4[%c0_7, %c0_8] : memref<1x16xbf16, #tpu.memory_space<vmem>>, vector<1x16xbf16>
    %19 = vector.shape_cast %18 : vector<1x16xbf16> to vector<1x1x16xbf16>
    %20 = vector.shape_cast %19 : vector<1x1x16xbf16> to vector<1x1x16xbf16>
    %21 = vector.broadcast %20 : vector<1x1x16xbf16> to vector<2x1x16xbf16>
    "tpu.trace_start"() <{level = 10 : i32, message = "bxd,bnd->bxn"}> : () -> ()
    %cst_9 = arith.constant dense<0.000000e+00> : vector<2x1x16xf32>
    %22 = tpu.matmul %21, %17, %cst_9 {dimension_numbers = #tpu.dot_dimension_numbers<[2], [2], [1], [1], [0, 0, 0, 1, 1, 1], [0], [0]>} : vector<2x1x16xbf16>, vector<2x16x16xbf16>, vector<2x1x16xf32> -> vector<2x1x16xf32>
    "tpu.trace_stop"() : () -> ()
    %c0_10 = arith.constant 0 : index
    %c0_11 = arith.constant 0 : index
    %23 = memref.load %arg5[%c0_10, %c0_11] : memref<1x1xf32, #tpu.memory_space<smem>>
    %24 = vector.broadcast %23 : f32 to vector<2x1x16xf32>
    %25 = arith.addf %22, %24 : vector<2x1x16xf32>
    %cst_12 = arith.constant dense<0xFF800000> : vector<2x1xf32>
    %26 = vector.multi_reduction <maximumf>, %25, %cst_12 [2] : vector<2x1x16xf32> to vector<2x1xf32>
    %27 = vector.shape_cast %26 : vector<2x1xf32> to vector<2x1x1xf32>
    %28 = vector.broadcast %27 : vector<2x1x1xf32> to vector<2x1x16xf32>
    %29 = arith.subf %25, %28 : vector<2x1x16xf32>
    %30 = math.exp %29 : vector<2x1x16xf32>
    %cst_13 = arith.constant dense<0.000000e+00> : vector<2x1xf32>
    %31 = vector.multi_reduction <add>, %30, %cst_13 [2] : vector<2x1x16xf32> to vector<2x1xf32>
    %32 = vector.shape_cast %31 : vector<2x1xf32> to vector<2x1x1xf32>
    %33 = tpu.reciprocal %32 {approx = true} : vector<2x1x1xf32> -> vector<2x1x1xf32>
    %34 = vector.broadcast %33 : vector<2x1x1xf32> to vector<2x1x16xf32>
    %35 = arith.mulf %30, %34 : vector<2x1x16xf32>
    %36 = arith.truncf %35 : vector<2x1x16xf32> to vector<2x1x16xbf16>
    "tpu.trace_start"() <{level = 10 : i32, message = "bxn,bnl->bxl"}> : () -> ()
    %cst_14 = arith.constant dense<0.000000e+00> : vector<2x1x32xf32>
    %37 = tpu.matmul %36, %0, %cst_14 {dimension_numbers = #tpu.dot_dimension_numbers<[2], [1], [1], [2], [0, 0, 0, 1, 1, 2], [0], [0]>} : vector<2x1x16xbf16>, vector<2x16x32xbf16>, vector<2x1x32xf32> -> vector<2x1x32xf32>
    "tpu.trace_stop"() : () -> ()
    %c0_15 = arith.constant 0 : index
    %c0_16 = arith.constant 0 : index
    %c0_17 = arith.constant 0 : index
    %38 = vector.load %arg6[%c0_15, %c0_16, %c0_17] : memref<2x1x32xf32, #tpu.memory_space<vmem>>, vector<2x1x32xf32>
    tpu.vector_store %arg6[%c0_15, %c0_16, %c0_17], %37 {strides = array<i32>} : memref<2x1x32xf32, #tpu.memory_space<vmem>>, vector<2x1x32xf32>,
    %c0_18 = arith.constant 0 : index
    %c0_19 = arith.constant 0 : index
    %c0_20 = arith.constant 0 : index
    %39 = vector.load %arg7[%c0_18, %c0_19, %c0_20] : memref<2x1x16xf32, #tpu.memory_space<vmem>>, vector<2x1x16xf32>
    tpu.vector_store %arg7[%c0_18, %c0_19, %c0_20], %35 {strides = array<i32>} : memref<2x1x16xf32, #tpu.memory_space<vmem>>, vector<2x1x16xf32>,
    %c0_21 = arith.constant 0 : index
    %c0_22 = arith.constant 0 : index
    %c0_23 = arith.constant 0 : index
    %40 = vector.load %arg8[%c0_21, %c0_22, %c0_23] : memref<2x1x16xf32, #tpu.memory_space<vmem>>, vector<2x1x16xf32>
    tpu.vector_store %arg8[%c0_21, %c0_22, %c0_23], %25 {strides = array<i32>} : memref<2x1x16xf32, #tpu.memory_space<vmem>>, vector<2x1x16xf32>,
    return
  }
  func.func @transform_0(%arg0: i32) -> (i32, i32, i32) {
    %c0_i32 = arith.constant 0 : i32
    %c0_i32_0 = arith.constant 0 : i32
    %c0_i32_1 = arith.constant 0 : i32
    return %arg0, %c0_i32, %c0_i32_0 : i32, i32, i32
  }
  func.func @transform_1(%arg0: i32) -> (i32, i32) {
    %c0_i32 = arith.constant 0 : i32
    %c0_i32_0 = arith.constant 0 : i32
    %c0_i32_1 = arith.constant 0 : i32
    return %c0_i32, %c0_i32_0 : i32, i32
  }
  func.func @transform_2(%arg0: i32) -> (i32, i32) {
    %c0_i32 = arith.constant 0 : i32
    %c0_i32_0 = arith.constant 0 : i32
    %c0_i32_1 = arith.constant 0 : i32
    return %c0_i32, %c0_i32_0 : i32, i32
  }
  func.func @transform_3(%arg0: i32) -> (i32, i32) {
    %c0_i32 = arith.constant 0 : i32
    %c0_i32_0 = arith.constant 0 : i32
    %c0_i32_1 = arith.constant 0 : i32
    return %c0_i32, %c0_i32_0 : i32, i32
  }
  func.func @transform_4(%arg0: i32) -> (i32, i32) {
    %c0_i32 = arith.constant 0 : i32
    %c0_i32_0 = arith.constant 0 : i32
    %c0_i32_1 = arith.constant 0 : i32
    return %c0_i32, %c0_i32_0 : i32, i32
  }
  func.func @transform_5(%arg0: i32) -> (i32, i32, i32) {
    %c0_i32 = arith.constant 0 : i32
    %c0_i32_0 = arith.constant 0 : i32
    %c0_i32_1 = arith.constant 0 : i32
    return %arg0, %c0_i32, %c0_i32_0 : i32, i32, i32
  }
  func.func @transform_6(%arg0: i32) -> (i32, i32, i32) {
    %c0_i32 = arith.constant 0 : i32
    %c0_i32_0 = arith.constant 0 : i32
    %c0_i32_1 = arith.constant 0 : i32
    return %arg0, %c0_i32, %c0_i32_0 : i32, i32, i32
  }
  func.func @transform_7(%arg0: i32) -> (i32, i32, i32) {
    %c0_i32 = arith.constant 0 : i32
    %c0_i32_0 = arith.constant 0 : i32
    %c0_i32_1 = arith.constant 0 : i32
    return %arg0, %c0_i32, %c0_i32_0 : i32, i32, i32
  }
}

</mosaic_0001>

<llo_original>
// kernel: tpu_custom_call.1
$region0: #{tpu_custom_call.1}
  #allocation0 [shape = 'u32[]', space=smem, size = 0x4, offset = 0x4, fixed_abs, tag = 'smem constant byte address 0x4 - core index']
  #allocation1 [shape = 'u32[144,128]{1,0:T(1,128)}', space=vmem, size = 0x12000, scoped, tag = 'internal scratch']
  #allocation2 [shape = 'f32[1,1]{1,0:T(1,128)S(6)}', space=smem, size = 0x200, scoped, tag = 'scoped memory for tpu_custom_call.1']
  %s0 = inlined_call_operand.hbm [shape: bf16[4,16,32], index: 0, kind: input, shape index: {}]
  %s1 = inlined_call_operand.hbm [shape: bf16[32,32], index: 1, kind: input, shape index: {}]
  %s2 = inlined_call_operand.vmem [shape: f32[1,32], index: 2, kind: input, shape index: {}]
  %s3 = inlined_call_operand.vmem [shape: bf16[1,16], index: 3, kind: input, shape index: {}]
  %s4 = inlined_call_operand.<no memory space> [shape: f32[1,1], index: 4, kind: input, shape index: {}]
  %s5 = inlined_call_operand.hbm [shape: f32[4,1,32], index: 5, kind: output, shape index: {0}]
  %s6 = inlined_call_operand.hbm [shape: f32[4,1,16], index: 6, kind: output, shape index: {1}]
  %s7 = inlined_call_operand.hbm [shape: f32[4,1,16], index: 7, kind: output, shape index: {2}]
  %8 = xla_tuple %s5, %s6, %s7
  %s9 = sld [smem:[#allocation0]]
  $region77: #{tpu_custom_call.1} parent=0
    _
  %s11 = ssub.s32 1, %s9
  %s12 = scalar_select 0, %s11, %s9
  %13 = sst [smem:[#allocation2]] %s4
  $region1: #{tpu_custom_call.1} parent=0
    #allocation3 [shape = 'u8[16384]{0}', space=vmem, size = 0x4000, scoped, tag = 'input window, operand 0']
    #allocation4 [shape = 's32[2]{0}', space=sflag, size = 0x8, scoped, tag = 'scoped memory for tpu_custom_call.1']
    #allocation5 [shape = 's32[2]{0}', space=sflag, size = 0x8, scoped, tag = 'scoped memory for tpu_custom_call.1']
    #allocation6 [shape = 'u8[8192]{0}', space=vmem, size = 0x2000, scoped, tag = 'input window, operand 1, single buffered']
    #allocation7 [shape = 's32[1]{0}', space=sflag, size = 0x4, scoped, tag = 'scoped memory for tpu_custom_call.1']
    #allocation8 [shape = 'u8[2048]{0}', space=vmem, size = 0x800, scoped, tag = 'output window, operand 0']
    #allocation9 [shape = 'u8[2048]{0}', space=vmem, size = 0x800, scoped, tag = 'output window, operand 1']
    #allocation10 [shape = 's32[2]{0}', space=sflag, size = 0x8, scoped, tag = 'scoped memory for tpu_custom_call.1']
    #allocation11 [shape = 'u8[2048]{0}', space=vmem, size = 0x800, scoped, tag = 'output window, operand 2']
    %14 = vsyncpa [#allocation4], 0
    %s15 = scalar_lea.sflag [#allocation4], 1
    %16 = vsyncpa %s15, 0
    %17 = vsyncpa [#allocation7], 0
    %18 = vsyncpa [#allocation5], 0
    %s19 = scalar_lea.sflag [#allocation5], 1
    %20 = vsyncpa %s19, 0
    %21 = vsyncpa [#allocation10], 0
    %s22 = scalar_lea.sflag [#allocation10], 1
    %23 = vsyncpa %s22, 0
    loop: start=0, step=1, limit=4
    $region2: #{tpu_custom_call.1} parent=1 // loop_pre_header
      _
    $region3: #{tpu_custom_call.1} parent=1 // loop_header
      %s25 = sphi 0, %s29
      %p26 = scmp.ge.s32.totalorder %s25, 4
      %s35 = sphi 0, %s37
      %s38 = sphi 0, %s35
      %s39 = sphi 0, %s38
      %s55 = sphi 0, %s39
      %s59 = sphi 0, %s59
      %s61 = sphi 0, %s59
      %s62 = sphi 0, %s61
      %s76 = sphi 0, %s62
      %s80 = sphi 0, %s80
      %s82 = sphi 0, %s80
      %s83 = sphi 0, %s82
      %s97 = sphi 0, %s83
      %s101 = sphi 0, %s101
      %s103 = sphi 0, %s101
      %s104 = sphi 0, %s103
      %s118 = sphi 0, %s104
      %s122 = sphi 0, %s122
      %s124 = sphi 0, %s122
      %s125 = sphi 0, %s124
      %s139 = sphi 0, %s125
      %s145 = sphi 0, %s147
      %s148 = sphi 0, %s145
      %s149 = sphi 0, %s148
      %s165 = sphi 0, %s149
      %s171 = sphi 0, %s173
      %s174 = sphi 0, %s171
      %s175 = sphi 0, %s174
      %s191 = sphi 0, %s175
      %s197 = sphi 0, %s199
      %s200 = sphi 0, %s197
      %s201 = sphi 0, %s200
      %s217 = sphi 0, %s201
    $region4: #{tpu_custom_call.1} parent=1 // loop_header_branch
      %28 = sbr.rel (%p26) target = $region8
    $region5: #{tpu_custom_call.1} parent=1 // loop_body
      %s30 = ssub.s32 %s25, 1
      %s31 = ssub.s32 %s25, 2
      %s32 = sadd.s32 %s25, 1
      %s33 = ssub.s32 %s25, %s32
      %p34 = scmp.eq.s32.totalorder %s33, 0
      %s36 = sadd.s32 %s35, 1
      %s37 = scalar_select %p34, %s35, %s36
      %p40 = pneg %p34
      %p41 = scmp.eq.s32.totalorder %s25, 1
      %p42 = por %p40, %p41
      %p43 = scmp.ne.s32.totalorder %s35, %s38
      %p44 = scmp.eq.s32.totalorder %s25, 0
      %p45 = por %p43, %p44
      %p46 = scmp.ne.s32.totalorder %s35, %s38
      %p47 = scmp.eq.s32.totalorder %s30, 1
      %p48 = por %p46, %p47
      %p49 = scmp.ne.s32.totalorder %s38, %s39
      %p50 = scmp.eq.s32.totalorder %s30, 0
      %p51 = por %p49, %p50
      %p52 = scmp.ne.s32.totalorder %s38, %s39
      %p53 = scmp.eq.s32.totalorder %s31, 1
      %p54 = por %p52, %p53
      %p56 = scmp.ne.s32.totalorder %s39, %s55
      %p57 = scmp.eq.s32.totalorder %s31, 0
      %p58 = por %p56, %p57
      %s60 = sadd.s32 %s59, 1
      %p63 = scmp.eq.s32.totalorder %s25, 1
      %p64 = scmp.ne.s32.totalorder %s59, %s61
      %p65 = scmp.eq.s32.totalorder %s25, 0
      %p66 = por %p64, %p65
      %p67 = scmp.ne.s32.totalorder %s59, %s61
      %p68 = scmp.eq.s32.totalorder %s30, 1
      %p69 = por %p67, %p68
      %p70 = scmp.ne.s32.totalorder %s61, %s62
      %p71 = scmp.eq.s32.totalorder %s30, 0
      %p72 = por %p70, %p71
      %p73 = scmp.ne.s32.totalorder %s61, %s62
      %p74 = scmp.eq.s32.totalorder %s31, 1
      %p75 = por %p73, %p74
      %p77 = scmp.ne.s32.totalorder %s62, %s76
      %p78 = scmp.eq.s32.totalorder %s31, 0
      %p79 = por %p77, %p78
      %s81 = sadd.s32 %s80, 1
      %p84 = scmp.eq.s32.totalorder %s25, 1
      %p85 = scmp.ne.s32.totalorder %s80, %s82
      %p86 = scmp.eq.s32.totalorder %s25, 0
      %p87 = por %p85, %p86
      %p88 = scmp.ne.s32.totalorder %s80, %s82
      %p89 = scmp.eq.s32.totalorder %s30, 1
      %p90 = por %p88, %p89
      %p91 = scmp.ne.s32.totalorder %s82, %s83
      %p92 = scmp.eq.s32.totalorder %s30, 0
      %p93 = por %p91, %p92
      %p94 = scmp.ne.s32.totalorder %s82, %s83
      %p95 = scmp.eq.s32.totalorder %s31, 1
      %p96 = por %p94, %p95
      %p98 = scmp.ne.s32.totalorder %s83, %s97
      %p99 = scmp.eq.s32.totalorder %s31, 0
      %p100 = por %p98, %p99
      %s102 = sadd.s32 %s101, 1
      %p105 = scmp.eq.s32.totalorder %s25, 1
      %p106 = scmp.ne.s32.totalorder %s101, %s103
      %p107 = scmp.eq.s32.totalorder %s25, 0
      %p108 = por %p106, %p107
      %p109 = scmp.ne.s32.totalorder %s101, %s103
      %p110 = scmp.eq.s32.totalorder %s30, 1
      %p111 = por %p109, %p110
      %p112 = scmp.ne.s32.totalorder %s103, %s104
      %p113 = scmp.eq.s32.totalorder %s30, 0
      %p114 = por %p112, %p113
      %p115 = scmp.ne.s32.totalorder %s103, %s104
      %p116 = scmp.eq.s32.totalorder %s31, 1
      %p117 = por %p115, %p116
      %p119 = scmp.ne.s32.totalorder %s104, %s118
      %p120 = scmp.eq.s32.totalorder %s31, 0
      %p121 = por %p119, %p120
      %s123 = sadd.s32 %s122, 1
      %p126 = scmp.eq.s32.totalorder %s25, 1
      %p127 = scmp.ne.s32.totalorder %s122, %s124
      %p128 = scmp.eq.s32.totalorder %s25, 0
      %p129 = por %p127, %p128
      %p130 = scmp.ne.s32.totalorder %s122, %s124
      %p131 = scmp.eq.s32.totalorder %s30, 1
      %p132 = por %p130, %p131
      %p133 = scmp.ne.s32.totalorder %s124, %s125
      %p134 = scmp.eq.s32.totalorder %s30, 0
      %p135 = por %p133, %p134
      %p136 = scmp.ne.s32.totalorder %s124, %s125
      %p137 = scmp.eq.s32.totalorder %s31, 1
      %p138 = por %p136, %p137
      %p140 = scmp.ne.s32.totalorder %s125, %s139
      %p141 = scmp.eq.s32.totalorder %s31, 0
      %p142 = por %p140, %p141
      %s143 = ssub.s32 %s25, %s32
      %p144 = scmp.eq.s32.totalorder %s143, 0
      %s146 = sadd.s32 %s145, 1
      %s147 = scalar_select %p144, %s145, %s146
      %p150 = pneg %p144
      %p151 = scmp.eq.s32.totalorder %s25, 1
      %p152 = por %p150, %p151
      %p153 = scmp.ne.s32.totalorder %s145, %s148
      %p154 = scmp.eq.s32.totalorder %s25, 0
      %p155 = por %p153, %p154
      %p156 = scmp.ne.s32.totalorder %s145, %s148
      %p157 = scmp.eq.s32.totalorder %s30, 1
      %p158 = por %p156, %p157
      %p159 = scmp.ne.s32.totalorder %s148, %s149
      %p160 = scmp.eq.s32.totalorder %s30, 0
      %p161 = por %p159, %p160
      %p162 = scmp.ne.s32.totalorder %s148, %s149
      %p163 = scmp.eq.s32.totalorder %s31, 1
      %p164 = por %p162, %p163
      %p166 = scmp.ne.s32.totalorder %s149, %s165
      %p167 = scmp.eq.s32.totalorder %s31, 0
      %p168 = por %p166, %p167
      %s169 = ssub.s32 %s25, %s32
      %p170 = scmp.eq.s32.totalorder %s169, 0
      %s172 = sadd.s32 %s171, 1
      %s173 = scalar_select %p170, %s171, %s172
      %p176 = pneg %p170
      %p177 = scmp.eq.s32.totalorder %s25, 1
      %p178 = por %p176, %p177
      %p179 = scmp.ne.s32.totalorder %s171, %s174
      %p180 = scmp.eq.s32.totalorder %s25, 0
      %p181 = por %p179, %p180
      %p182 = scmp.ne.s32.totalorder %s171, %s174
      %p183 = scmp.eq.s32.totalorder %s30, 1
      %p184 = por %p182, %p183
      %p185 = scmp.ne.s32.totalorder %s174, %s175
      %p186 = scmp.eq.s32.totalorder %s30, 0
      %p187 = por %p185, %p186
      %p188 = scmp.ne.s32.totalorder %s174, %s175
      %p189 = scmp.eq.s32.totalorder %s31, 1
      %p190 = por %p188, %p189
      %p192 = scmp.ne.s32.totalorder %s175, %s191
      %p193 = scmp.eq.s32.totalorder %s31, 0
      %p194 = por %p192, %p193
      %s195 = ssub.s32 %s25, %s32
      %p196 = scmp.eq.s32.totalorder %s195, 0
      %s198 = sadd.s32 %s197, 1
      %s199 = scalar_select %p196, %s197, %s198
      %p202 = pneg %p196
      %p203 = scmp.eq.s32.totalorder %s25, 1
      %p204 = por %p202, %p203
      %p205 = scmp.ne.s32.totalorder %s197, %s200
      %p206 = scmp.eq.s32.totalorder %s25, 0
      %p207 = por %p205, %p206
      %p208 = scmp.ne.s32.totalorder %s197, %s200
      %p209 = scmp.eq.s32.totalorder %s30, 1
      %p210 = por %p208, %p209
      %p211 = scmp.ne.s32.totalorder %s200, %s201
      %p212 = scmp.eq.s32.totalorder %s30, 0
      %p213 = por %p211, %p212
      %p214 = scmp.ne.s32.totalorder %s200, %s201
      %p215 = scmp.eq.s32.totalorder %s31, 1
      %p216 = por %p214, %p215
      %p218 = scmp.ne.s32.totalorder %s201, %s217
      %p219 = scmp.eq.s32.totalorder %s31, 0
      %p220 = por %p218, %p219
      %p221 = scmp.le.s32.totalorder 1, %s25
      %p222 = scmp.lt.s32.totalorder %s25, 3
      %p223 = pnand %p221, %p222
      %p224 = pneg %p223
      // Predicated region
      $region9: #{tpu_custom_call.1} parent=5 // pred_check
        _
      $region10: #{tpu_custom_call.1} parent=5 // pred_check_branch
        %226 = sbr.rel (%p223) target = $region12
      $region11: #{tpu_custom_call.1} parent=5 // pred_region
        %s227 = ssub.s32 %s25, 1
        // Predicated region
        $region13: #{tpu_custom_call.1} parent=11 // pred_check
          %p228 = pneg %p72
        $region14: #{tpu_custom_call.1} parent=11 // pred_check_branch
          %230 = sbr.rel (%p228) target = $region16
        $region15: #{tpu_custom_call.1} parent=11 // pred_region
          %s232 = ssub.s32 256, 256
          %233 = vsyncadd [#allocation7], %s232
          %s234 = sshll.u32 [#allocation6], 4
          %s235 = int_to_ptr.vmem [resolvable:$true] %s234
          %240 = dma.hbm_to_vmem [thread:$0]  %s1, 256, %s235, [#allocation7], 64, 64, 4
        $region16: #{tpu_custom_call.1} parent=11 // pred_fallthru
          _
        // Predicated region
        $region17: #{tpu_custom_call.1} parent=11 // pred_check
          %p241 = pneg %p93
        $region18: #{tpu_custom_call.1} parent=11 // pred_check_branch
          %243 = sbr.rel (%p241) target = $region20
        $region19: #{tpu_custom_call.1} parent=11 // pred_region
          _
        $region20: #{tpu_custom_call.1} parent=11 // pred_fallthru
          _
        // Predicated region
        $region21: #{tpu_custom_call.1} parent=11 // pred_check
          %p244 = pneg %p114
        $region22: #{tpu_custom_call.1} parent=11 // pred_check_branch
          %246 = sbr.rel (%p244) target = $region24
        $region23: #{tpu_custom_call.1} parent=11 // pred_region
          _
        $region24: #{tpu_custom_call.1} parent=11 // pred_fallthru
          _
        // Predicated region
        $region25: #{tpu_custom_call.1} parent=11 // pred_check
          %p247 = pneg %p135
        $region26: #{tpu_custom_call.1} parent=11 // pred_check_branch
          %249 = sbr.rel (%p247) target = $region28
        $region27: #{tpu_custom_call.1} parent=11 // pred_region
          _
        $region28: #{tpu_custom_call.1} parent=11 // pred_fallthru
          _
      $region12: #{tpu_custom_call.1} parent=5 // pred_fallthru
        _
      %p250 = scmp.lt.s32.totalorder %s25, 2
      // Predicated region
      $region29: #{tpu_custom_call.1} parent=5 // pred_check
        %p251 = pneg %p250
      $region30: #{tpu_custom_call.1} parent=5 // pred_check_branch
        %253 = sbr.rel (%p251) target = $region32
      $region31: #{tpu_custom_call.1} parent=5 // pred_region
        // Predicated region
        $region33: #{tpu_custom_call.1} parent=31 // pred_check
          %p254 = pneg %p45
        $region34: #{tpu_custom_call.1} parent=31 // pred_check_branch
          %256 = sbr.rel (%p254) target = $region36
        $region35: #{tpu_custom_call.1} parent=31 // pred_region
          %s257 = sand.u32 %s35, 1
          %s258 = scalar_lea.sflag [#allocation4], %s257
          %s259 = sand.u32 %s35, 1
          %s260 = smul.addr %s259, 16
          %s261 = scalar_lea.vmem [#allocation3], %s260
          %s262 = smul.u32 2, %s25
          %s264 = ssub.s32 256, 256
          %265 = vsyncadd %s258, %s264
          %s266 = smul.addr %s262, 2
          %s267 = smul.addr %s266, 64
          %s268 = scalar_lea.hbm %s0, %s267
          %s269 = sshll.u32 %s261, 4
          %s270 = int_to_ptr.vmem [resolvable:$true] %s269
          %275 = dma.hbm_to_vmem [thread:$0]  %s268, 256, %s270, %s258, 64, 64, 4
        $region36: #{tpu_custom_call.1} parent=31 // pred_fallthru
          _
      $region32: #{tpu_custom_call.1} parent=5 // pred_fallthru
        _
      %p276 = scmp.le.s32.totalorder 1, %s25
      %p277 = scmp.lt.s32.totalorder %s25, 3
      %p278 = pnand %p276, %p277
      %p279 = pneg %p278
      // Predicated region
      $region37: #{tpu_custom_call.1} parent=5 // pred_check
        _
      $region38: #{tpu_custom_call.1} parent=5 // pred_check_branch
        %281 = sbr.rel (%p278) target = $region40
      $region39: #{tpu_custom_call.1} parent=5 // pred_region
        %s282 = ssub.s32 %s25, 1
        %s283 = sand.u32 %s38, 1
        %s284 = scalar_lea.sflag [#allocation4], %s283
        %s285 = sand.u32 %s38, 1
        %s286 = smul.addr %s285, 16
        %s287 = scalar_lea.vmem [#allocation3], %s286
        // Predicated region
        $region41: #{tpu_custom_call.1} parent=39 // pred_check
          %p288 = pneg %p51
        $region42: #{tpu_custom_call.1} parent=39 // pred_check_branch
          %290 = sbr.rel (%p288) target = $region44
        $region43: #{tpu_custom_call.1} parent=39 // pred_region
          %291 = dma.done %s284, 256
        $region44: #{tpu_custom_call.1} parent=39 // pred_fallthru
          _
        // Predicated region
        $region45: #{tpu_custom_call.1} parent=39 // pred_check
          %p292 = pneg %p72
        $region46: #{tpu_custom_call.1} parent=39 // pred_check_branch
          %294 = sbr.rel (%p292) target = $region48
        $region47: #{tpu_custom_call.1} parent=39 // pred_region
          %295 = dma.done [#allocation7], 256
        $region48: #{tpu_custom_call.1} parent=39 // pred_fallthru
          _
        %s296 = sand.u32 %s38, 1
        %s297 = scalar_lea.sflag [#allocation4], %s296
        %s298 = sand.u32 %s38, 1
        %s299 = smul.addr %s298, 16
        %s300 = scalar_lea.vmem [#allocation3], %s299
        %p301 = pneg %p51
        %p302 = pneg %p48
        %p303 = pneg %p72
        %p304 = pneg %p69
        %p305 = pneg %p93
        %p306 = pneg %p90
        %p307 = pneg %p114
        %p308 = pneg %p111
        %p309 = pneg %p135
        %p310 = pneg %p132
        %p311 = pneg %p161
        %p312 = pneg %p158
        %s313 = sand.u32 %s148, 1
        %s314 = scalar_lea.sflag [#allocation5], %s313
        %s315 = sand.u32 %s148, 1
        %s316 = smul.addr %s315, 2
        %s317 = scalar_lea.vmem [#allocation8], %s316
        %p318 = pneg %p187
        %p319 = pneg %p184
        %s320 = sand.u32 %s30, 1
        %s321 = scalar_lea.sflag [#allocation10], %s320
        %s322 = sand.u32 %s174, 1
        %s323 = smul.addr %s322, 2
        %s324 = scalar_lea.vmem [#allocation9], %s323
        %p325 = pneg %p213
        %p326 = pneg %p210
        %s327 = sand.u32 %s30, 1
        %s328 = scalar_lea.sflag [#allocation10], %s327
        %s329 = sand.u32 %s200, 1
        %s330 = smul.addr %s329, 2
        %s331 = scalar_lea.vmem [#allocation11], %s330
        %s332 = smul.u32 2, %s30
        %s333 = smul.u32 2, %s30
        %s334 = smul.u32 2, %s30
        %s335 = smul.u32 2, %s30
        %v337 = vld [vmem:[%s287] sm:$0xf]
        %v338 = vld [vmem:[%s287 + $0x4] sm:$0xf]
        %v339 = vld [vmem:[%s287 + $0x8] sm:$0xf]
        %v340 = vld [vmem:[%s287 + $0xc] sm:$0xf]
        %v341 = vld [vmem:[#allocation6] sm:$0xf]
        %v342 = vld [vmem:[#allocation6 + $0x4] sm:$0xf]
        %v343 = vld [vmem:[#allocation6 + $0x8] sm:$0xf]
        %v344 = vld [vmem:[#allocation6 + $0xc] sm:$0xf]
        %v345 = vld [vmem:[%s2] sm:$0x1]
        %v347 = vlaneseq
        %v348 = vshrl.u32 %v347, 7
        %v349 = vsub.s32 0, %v348
        %v350 = vrot.slane %v345, %v349
        %v356 = vunpack.c.l.b16 %v337
        %v357 = vunpack.c.l.b16 %v338
        %v358 = vunpack.c.l.b16 %v339
        %v359 = vunpack.c.l.b16 %v340
        %v360 = vpack.c.b16 %v357, %v356
        %v361 = vpack.c.b16 %v359, %v358
        %v366 = vunpack.c.l.b16 %v341
        %v367 = vunpack.c.l.b16 %v342
        %v368 = vunpack.c.l.b16 %v343
        %v369 = vunpack.c.l.b16 %v344
        %v370 = vpack.c.b16 %v367, %v366
        %v371 = vpack.c.b16 %v369, %v368
        %vm374 = vcmask 261120
        %v376 = vsel %vm374, %v360, 0
        %v379 = vsel %vm374, %v361, 0
        %381 = vmatprep.subr.bf16.mxu0 0
        %382 = vmatpush1.bf16.msra.mxu0 %v370
        %383 = vmatprep.subr.bf16.mxu0 0
        %384 = vmatpush1.bf16.msra.mxu0 %v371
        %385 = vmatprep.subr.bf16.mxu0 0
        %386 = vmatpush1.bf16.msra.mxu0 0
        %387 = vmatprep.subr.bf16.mxu0 0
        %388 = vmatpush1.bf16.msra.mxu0 0
        %389 = vmatprep.subr.bf16.mxu0 0
        %390 = vmatpush1.bf16.msra.mxu0 0
        %391 = vmatprep.subr.bf16.mxu0 0
        %392 = vmatpush1.bf16.msra.mxu0 0
        %393 = vmatprep.subr.bf16.mxu0 0
        %394 = vmatpush1.bf16.msra.mxu0 0
        %395 = vmatprep.subr.bf16.mxu0 0
        %396 = vmatpush1.bf16.msra.mxu0 0
        %397 = vmatprep.subr.bf16.mxu0 0
        %398 = vmatpush1.bf16.msra.mxu0 0
        %399 = vmatprep.subr.bf16.mxu0 0
        %400 = vmatpush1.bf16.msra.mxu0 0
        %401 = vmatprep.subr.bf16.mxu0 0
        %402 = vmatpush1.bf16.msra.mxu0 0
        %403 = vmatprep.subr.bf16.mxu0 0
        %404 = vmatpush1.bf16.msra.mxu0 0
        %405 = vmatprep.subr.bf16.mxu0 0
        %406 = vmatpush1.bf16.msra.mxu0 0
        %407 = vmatprep.subr.bf16.mxu0 0
        %408 = vmatpush1.bf16.msra.mxu0 0
        %409 = vmatprep.subr.bf16.mxu0 0
        %410 = vmatpush1.bf16.msra.mxu0 0
        %411 = vmatprep.subr.bf16.mxu0 0
        %412 = vmatpush1.bf16.msra.mxu0 0
        %413 = vmatprep.mubr.bf16.mxu0 0
        %414 = vmatmul.mubr.bf16.gmra.mrb[0].mxu0 %v376
        %v415 = vpop.f32.mrb[0].mxu0
        %v416 = vadd.f32 %v350, %v415
        %v417 = vpop.f32.mrb[0].mxu0
        %v418 = vpop.f32.mrb[0].mxu0
        %v419 = vadd.f32 %v350, %v418
        %v420 = vpop.f32.mrb[0].mxu0
        %421 = vmatprep.mubr.bf16.mxu0 0
        %422 = vmatmul.mubr.bf16.gmra.mrb[0].mxu0 %v379
        %v423 = vpop.f32.mrb[0].mxu0
        %v424 = vadd.f32 %v350, %v423
        %v425 = vpop.f32.mrb[0].mxu0
        %v426 = vpop.f32.mrb[0].mxu0
        %v427 = vadd.f32 %v350, %v426
        %v428 = vpop.f32.mrb[0].mxu0
        %429 = vdwg.mxu0
        %v430 = vtanh.pop %v416
        %v431 = vtanh.pop %v419
        %v432 = vtanh.pop %v424
        %v433 = vtanh.pop %v427
        %v434 = vxor.u32 %v416, 2147483648
        %v435 = vxor.u32 %v419, 2147483648
        %v436 = vxor.u32 %v424, 2147483648
        %v437 = vxor.u32 %v427, 2147483648
        %v438 = vmul.f32 %v434, 1.442695
        %v439 = vpow.pop %v438
        %v440 = vmul.f32 %v435, 1.442695
        %v441 = vpow.pop %v440
        %v442 = vmul.f32 %v436, 1.442695
        %v443 = vpow.pop %v442
        %v444 = vmul.f32 %v437, 1.442695
        %v445 = vpow.pop %v444
        %v446 = vadd.f32 %v439, 1.0
        %v447 = vadd.f32 %v441, 1.0
        %v448 = vadd.f32 %v443, 1.0
        %v449 = vadd.f32 %v445, 1.0
        %v450 = vrcp.pop %v446
        %v451 = vmul.f32 1.0, %v450
        %v452 = vrcp.pop %v447
        %v453 = vmul.f32 1.0, %v452
        %v454 = vrcp.pop %v448
        %v455 = vmul.f32 1.0, %v454
        %v456 = vrcp.pop %v449
        %v457 = vmul.f32 1.0, %v456
        %462 = vrot.lane.b32.xlu0 %v451, 112
        %v463 = vpop.permute.xlu0 %462
        %464 = vrot.lane.b32.xlu0 %v453, 112
        %v465 = vpop.permute.xlu0 %464
        %466 = vrot.lane.b32.xlu0 %v455, 112
        %v467 = vpop.permute.xlu0 %466
        %468 = vrot.lane.b32.xlu0 %v457, 112
        %v469 = vpop.permute.xlu0 %468
        %v474 = vmul.f32 %v430, %v463
        %v475 = vmul.f32 %v431, %v465
        %v476 = vmul.f32 %v432, %v467
        %v477 = vmul.f32 %v433, %v469
        %v478 = vpack.c.bf16 %v475, %v474
        %v479 = vpack.c.bf16 %v477, %v476
        %v480 = vld [vmem:[%s3] sm:$0x1]
        %s481 = sld [smem:[#allocation2]]
        %v482 = vstv %s481
        %vm483 = vcmask 130048
        %v485 = vsel %vm483, %v480, 0
        %v488 = vsel %vm483, %v478, 0
        %490 = vmatprep.subr.bf16.mxu0 0
        %491 = vmatpush1.bf16.xpose.msra.mxu0 %v488
        %492 = vmatprep.subr.bf16.mxu0 0
        %493 = vmatpush1.bf16.xpose.msra.mxu0 0
        %494 = vmatprep.subr.bf16.mxu0 0
        %495 = vmatpush1.bf16.xpose.msra.mxu0 0
        %496 = vmatprep.subr.bf16.mxu0 0
        %497 = vmatpush1.bf16.xpose.msra.mxu0 0
        %498 = vmatprep.subr.bf16.mxu0 0
        %499 = vmatpush1.bf16.xpose.msra.mxu0 0
        %500 = vmatprep.subr.bf16.mxu0 0
        %501 = vmatpush1.bf16.xpose.msra.mxu0 0
        %502 = vmatprep.subr.bf16.mxu0 0
        %503 = vmatpush1.bf16.xpose.msra.mxu0 0
        %504 = vmatprep.subr.bf16.mxu0 0
        %505 = vmatpush1.bf16.xpose.msra.mxu0 0
        %506 = vmatprep.subr.bf16.mxu0 0
        %507 = vmatpush1.bf16.xpose.msra.mxu0 0
        %508 = vmatprep.subr.bf16.mxu0 0
        %509 = vmatpush1.bf16.xpose.msra.mxu0 0
        %510 = vmatprep.subr.bf16.mxu0 0
        %511 = vmatpush1.bf16.xpose.msra.mxu0 0
        %512 = vmatprep.subr.bf16.mxu0 0
        %513 = vmatpush1.bf16.xpose.msra.mxu0 0
        %514 = vmatprep.subr.bf16.mxu0 0
        %515 = vmatpush1.bf16.xpose.msra.mxu0 0
        %516 = vmatprep.subr.bf16.mxu0 0
        %517 = vmatpush1.bf16.xpose.msra.mxu0 0
        %518 = vmatprep.subr.bf16.mxu0 0
        %519 = vmatpush1.bf16.xpose.msra.mxu0 0
        %520 = vmatprep.subr.bf16.mxu0 0
        %521 = vmatpush1.bf16.xpose.msra.mxu0 0
        %522 = vmatprep.mubr.bf16.mxu0 0
        %523 = vmatmul.mubr.bf16.gmra.mrb[0].mxu0 %v485
        %v524 = vpop.f32.mrb[0].mxu0
        %v525 = vadd.f32 %v482, %v524
        %v526 = vpop.f32.mrb[0].mxu0
        %v527 = vpop.f32.mrb[0].mxu0
        %v528 = vpop.f32.mrb[0].mxu0
        %529 = vdwg.mxu0
        %v531 = vsel %vm483, %v479, 0
        %533 = vmatprep.subr.bf16.mxu0 0
        %534 = vmatpush1.bf16.xpose.msra.mxu0 %v531
        %535 = vmatprep.subr.bf16.mxu0 0
        %536 = vmatpush1.bf16.xpose.msra.mxu0 0
        %537 = vmatprep.subr.bf16.mxu0 0
        %538 = vmatpush1.bf16.xpose.msra.mxu0 0
        %539 = vmatprep.subr.bf16.mxu0 0
        %540 = vmatpush1.bf16.xpose.msra.mxu0 0
        %541 = vmatprep.subr.bf16.mxu0 0
        %542 = vmatpush1.bf16.xpose.msra.mxu0 0
        %543 = vmatprep.subr.bf16.mxu0 0
        %544 = vmatpush1.bf16.xpose.msra.mxu0 0
        %545 = vmatprep.subr.bf16.mxu0 0
        %546 = vmatpush1.bf16.xpose.msra.mxu0 0
        %547 = vmatprep.subr.bf16.mxu0 0
        %548 = vmatpush1.bf16.xpose.msra.mxu0 0
        %549 = vmatprep.subr.bf16.mxu0 0
        %550 = vmatpush1.bf16.xpose.msra.mxu0 0
        %551 = vmatprep.subr.bf16.mxu0 0
        %552 = vmatpush1.bf16.xpose.msra.mxu0 0
        %553 = vmatprep.subr.bf16.mxu0 0
        %554 = vmatpush1.bf16.xpose.msra.mxu0 0
        %555 = vmatprep.subr.bf16.mxu0 0
        %556 = vmatpush1.bf16.xpose.msra.mxu0 0
        %557 = vmatprep.subr.bf16.mxu0 0
        %558 = vmatpush1.bf16.xpose.msra.mxu0 0
        %559 = vmatprep.subr.bf16.mxu0 0
        %560 = vmatpush1.bf16.xpose.msra.mxu0 0
        %561 = vmatprep.subr.bf16.mxu0 0
        %562 = vmatpush1.bf16.xpose.msra.mxu0 0
        %563 = vmatprep.subr.bf16.mxu0 0
        %564 = vmatpush1.bf16.xpose.msra.mxu0 0
        %565 = vmatprep.mubr.bf16.mxu0 0
        %566 = vmatmul.mubr.bf16.gmra.mrb[0].mxu0 %v485
        %v567 = vpop.f32.mrb[0].mxu0
        %v568 = vadd.f32 %v482, %v567
        %v569 = vpop.f32.mrb[0].mxu0
        %v570 = vpop.f32.mrb[0].mxu0
        %v571 = vpop.f32.mrb[0].mxu0
        %572 = vdwg.mxu0
        %vm573 = vcmask 122880
        %v574 = vsel %vm573, %v525, -inf
        %575 = vmax.xlane.f32.xlu0 %v574
        %v576 = vpop.xlane.xlu0 %575
        %v577 = vsel %vm573, %v568, -inf
        %578 = vmax.xlane.f32.xlu0 %v577
        %v579 = vpop.xlane.xlu0 %578
        %v580 = vsub.f32 %v525, %v576
        %v581 = vsub.f32 %v568, %v579
        %v582 = vmul.f32 %v580, 1.442695
        %v583 = vpow.pop %v582
        %v584 = vmul.f32 %v581, 1.442695
        %v585 = vpow.pop %v584
        %v586 = vsel %vm573, %v583, 0.0
        %587 = vadd.xlane.f32.xlu0 %v586
        %v588 = vpop.xlane.xlu0 %587
        %v589 = vsel %vm573, %v585, 0.0
        %590 = vadd.xlane.f32.xlu0 %v589
        %v591 = vpop.xlane.xlu0 %590
        %v592 = vrcp.pop %v588
        %v593 = vrcp.pop %v591
        %v594 = vmul.f32 %v583, %v592
        %v595 = vmul.f32 %v585, %v593
        %v596 = vpack.c.bf16 %v594, %v594
        %v597 = vpack.c.bf16 %v595, %v595
        %v600 = vsel %vm483, %v596, 0
        %602 = vmatprep.subr.bf16.mxu0 0
        %603 = vmatpush1.bf16.msra.mxu0 %v360
        %604 = vmatprep.subr.bf16.mxu0 0
        %605 = vmatpush1.bf16.msra.mxu0 0
        %606 = vmatprep.subr.bf16.mxu0 0
        %607 = vmatpush1.bf16.msra.mxu0 0
        %608 = vmatprep.subr.bf16.mxu0 0
        %609 = vmatpush1.bf16.msra.mxu0 0
        %610 = vmatprep.subr.bf16.mxu0 0
        %611 = vmatpush1.bf16.msra.mxu0 0
        %612 = vmatprep.subr.bf16.mxu0 0
        %613 = vmatpush1.bf16.msra.mxu0 0
        %614 = vmatprep.subr.bf16.mxu0 0
        %615 = vmatpush1.bf16.msra.mxu0 0
        %616 = vmatprep.subr.bf16.mxu0 0
        %617 = vmatpush1.bf16.msra.mxu0 0
        %618 = vmatprep.subr.bf16.mxu0 0
        %619 = vmatpush1.bf16.msra.mxu0 0
        %620 = vmatprep.subr.bf16.mxu0 0
        %621 = vmatpush1.bf16.msra.mxu0 0
        %622 = vmatprep.subr.bf16.mxu0 0
        %623 = vmatpush1.bf16.msra.mxu0 0
        %624 = vmatprep.subr.bf16.mxu0 0
        %625 = vmatpush1.bf16.msra.mxu0 0
        %626 = vmatprep.subr.bf16.mxu0 0
        %627 = vmatpush1.bf16.msra.mxu0 0
        %628 = vmatprep.subr.bf16.mxu0 0
        %629 = vmatpush1.bf16.msra.mxu0 0
        %630 = vmatprep.subr.bf16.mxu0 0
        %631 = vmatpush1.bf16.msra.mxu0 0
        %632 = vmatprep.subr.bf16.mxu0 0
        %633 = vmatpush1.bf16.msra.mxu0 0
        %634 = vmatprep.mubr.bf16.mxu0 0
        %635 = vmatmul.mubr.bf16.gmra.mrb[0].mxu0 %v600
        %v636 = vpop.f32.mrb[0].mxu0
        %v637 = vadd.f32 0.0, %v636
        %v638 = vpop.f32.mrb[0].mxu0
        %v639 = vpop.f32.mrb[0].mxu0
        %v640 = vpop.f32.mrb[0].mxu0
        %641 = vdwg.mxu0
        %v644 = vsel %vm483, %v597, 0
        %646 = vmatprep.subr.bf16.mxu0 0
        %647 = vmatpush1.bf16.msra.mxu0 %v361
        %648 = vmatprep.subr.bf16.mxu0 0
        %649 = vmatpush1.bf16.msra.mxu0 0
        %650 = vmatprep.subr.bf16.mxu0 0
        %651 = vmatpush1.bf16.msra.mxu0 0
        %652 = vmatprep.subr.bf16.mxu0 0
        %653 = vmatpush1.bf16.msra.mxu0 0
        %654 = vmatprep.subr.bf16.mxu0 0
        %655 = vmatpush1.bf16.msra.mxu0 0
        %656 = vmatprep.subr.bf16.mxu0 0
        %657 = vmatpush1.bf16.msra.mxu0 0
        %658 = vmatprep.subr.bf16.mxu0 0
        %659 = vmatpush1.bf16.msra.mxu0 0
        %660 = vmatprep.subr.bf16.mxu0 0
        %661 = vmatpush1.bf16.msra.mxu0 0
        %662 = vmatprep.subr.bf16.mxu0 0
        %663 = vmatpush1.bf16.msra.mxu0 0
        %664 = vmatprep.subr.bf16.mxu0 0
        %665 = vmatpush1.bf16.msra.mxu0 0
        %666 = vmatprep.subr.bf16.mxu0 0
        %667 = vmatpush1.bf16.msra.mxu0 0
        %668 = vmatprep.subr.bf16.mxu0 0
        %669 = vmatpush1.bf16.msra.mxu0 0
        %670 = vmatprep.subr.bf16.mxu0 0
        %671 = vmatpush1.bf16.msra.mxu0 0
        %672 = vmatprep.subr.bf16.mxu0 0
        %673 = vmatpush1.bf16.msra.mxu0 0
        %674 = vmatprep.subr.bf16.mxu0 0
        %675 = vmatpush1.bf16.msra.mxu0 0
        %676 = vmatprep.subr.bf16.mxu0 0
        %677 = vmatpush1.bf16.msra.mxu0 0
        %678 = vmatprep.mubr.bf16.mxu0 0
        %679 = vmatmul.mubr.bf16.gmra.mrb[0].mxu0 %v644
        %v680 = vpop.f32.mrb[0].mxu0
        %v681 = vadd.f32 0.0, %v680
        %v682 = vpop.f32.mrb[0].mxu0
        %v683 = vpop.f32.mrb[0].mxu0
        %v684 = vpop.f32.mrb[0].mxu0
        %685 = vdwg.mxu0
        %vm686 = vcmask 253952
        %687 = vst.msk [vmem:[%s317] sm:$0x1] %vm686, %v637
        %688 = vst.msk [vmem:[%s317 + $0x1] sm:$0x1] %vm686, %v681
        %689 = vst.msk [vmem:[%s324] sm:$0x1] %vm573, %v594
        %690 = vst.msk [vmem:[%s324 + $0x1] sm:$0x1] %vm573, %v595
        %691 = vst.msk [vmem:[%s331] sm:$0x1] %vm573, %v525
        %692 = vst.msk [vmem:[%s331 + $0x1] sm:$0x1] %vm573, %v568
        %s693 = sand.u32 %s148, 1
        %s694 = scalar_lea.sflag [#allocation5], %s693
        %s695 = sand.u32 %s148, 1
        %s696 = smul.addr %s695, 2
        %s697 = scalar_lea.vmem [#allocation8], %s696
        %s698 = sand.u32 %s30, 1
        %s699 = scalar_lea.sflag [#allocation10], %s698
        %s700 = sand.u32 %s174, 1
        %s701 = smul.addr %s700, 2
        %s702 = scalar_lea.vmem [#allocation9], %s701
        %s703 = sand.u32 %s30, 1
        %s704 = scalar_lea.sflag [#allocation10], %s703
        %s705 = sand.u32 %s200, 1
        %s706 = smul.addr %s705, 2
        %s707 = scalar_lea.vmem [#allocation11], %s706
        // Predicated region
        $region49: #{tpu_custom_call.1} parent=39 // pred_check
          %p708 = pneg %p158
        $region50: #{tpu_custom_call.1} parent=39 // pred_check_branch
          %710 = sbr.rel (%p708) target = $region52
        $region51: #{tpu_custom_call.1} parent=39 // pred_region
          %s711 = smul.u32 2, %s30
          %s713 = ssub.s32 32, 32
          %714 = vsyncadd %s694, %s713
          %s715 = smul.addr %s711, 16
          %s716 = scalar_lea.hbm %s5, %s715
          %s717 = sshll.u32 %s697, 4
          %s718 = int_to_ptr.vmem [resolvable:$true] %s717
          %723 = dma.vmem_to_hbm [thread:$0]  %s718, 32, %s716, %s694, 16, 16, 1
        $region52: #{tpu_custom_call.1} parent=39 // pred_fallthru
          _
        // Predicated region
        $region53: #{tpu_custom_call.1} parent=39 // pred_check
          %p724 = pneg %p184
        $region54: #{tpu_custom_call.1} parent=39 // pred_check_branch
          %726 = sbr.rel (%p724) target = $region56
        $region55: #{tpu_custom_call.1} parent=39 // pred_region
          %s727 = smul.u32 2, %s30
          %s729 = ssub.s32 32, 32
          %730 = vsyncadd %s699, %s729
          %s731 = smul.addr %s727, 16
          %s732 = scalar_lea.hbm %s6, %s731
          %s733 = sshll.u32 %s702, 4
          %s734 = int_to_ptr.vmem [resolvable:$true] %s733
          %739 = dma.vmem_to_hbm [thread:$0]  %s734, 32, %s732, %s699, 16, 16, 1
        $region56: #{tpu_custom_call.1} parent=39 // pred_fallthru
          _
        // Predicated region
        $region57: #{tpu_custom_call.1} parent=39 // pred_check
          %p740 = pneg %p210
        $region58: #{tpu_custom_call.1} parent=39 // pred_check_branch
          %742 = sbr.rel (%p740) target = $region60
        $region59: #{tpu_custom_call.1} parent=39 // pred_region
          %s743 = smul.u32 2, %s30
          %s745 = ssub.s32 32, 32
          %746 = vsyncadd %s704, %s745
          %s747 = smul.addr %s743, 16
          %s748 = scalar_lea.hbm %s7, %s747
          %s749 = sshll.u32 %s707, 4
          %s750 = int_to_ptr.vmem [resolvable:$true] %s749
          %755 = dma.vmem_to_hbm [thread:$0]  %s750, 32, %s748, %s704, 16, 16, 1
        $region60: #{tpu_custom_call.1} parent=39 // pred_fallthru
          _
      $region40: #{tpu_custom_call.1} parent=5 // pred_fallthru
        _
      %p756 = scmp.le.s32.totalorder 2, %s25
      // Predicated region
      $region61: #{tpu_custom_call.1} parent=5 // pred_check
        %p757 = pneg %p756
      $region62: #{tpu_custom_call.1} parent=5 // pred_check_branch
        %759 = sbr.rel (%p757) target = $region64
      $region63: #{tpu_custom_call.1} parent=5 // pred_region
        %s760 = ssub.s32 %s25, 2
        // Predicated region
        $region65: #{tpu_custom_call.1} parent=63 // pred_check
          %p761 = pneg %p164
        $region66: #{tpu_custom_call.1} parent=63 // pred_check_branch
          %763 = sbr.rel (%p761) target = $region68
        $region67: #{tpu_custom_call.1} parent=63 // pred_region
          %s764 = sand.u32 %s149, 1
          %s765 = scalar_lea.sflag [#allocation5], %s764
          %s766 = sand.u32 %s149, 1
          %s767 = smul.addr %s766, 2
          %s768 = scalar_lea.vmem [#allocation8], %s767
          %769 = dma.done %s765, 32
        $region68: #{tpu_custom_call.1} parent=63 // pred_fallthru
          _
        // Predicated region
        $region69: #{tpu_custom_call.1} parent=63 // pred_check
          %p770 = pneg %p190
        $region70: #{tpu_custom_call.1} parent=63 // pred_check_branch
          %772 = sbr.rel (%p770) target = $region72
        $region71: #{tpu_custom_call.1} parent=63 // pred_region
          %s773 = sand.u32 %s31, 1
          %s774 = scalar_lea.sflag [#allocation10], %s773
          %s775 = sand.u32 %s175, 1
          %s776 = smul.addr %s775, 2
          %s777 = scalar_lea.vmem [#allocation9], %s776
          %778 = dma.done %s774, 32
        $region72: #{tpu_custom_call.1} parent=63 // pred_fallthru
          _
        // Predicated region
        $region73: #{tpu_custom_call.1} parent=63 // pred_check
          %p779 = pneg %p216
        $region74: #{tpu_custom_call.1} parent=63 // pred_check_branch
          %781 = sbr.rel (%p779) target = $region76
        $region75: #{tpu_custom_call.1} parent=63 // pred_region
          %s782 = sand.u32 %s31, 1
          %s783 = scalar_lea.sflag [#allocation10], %s782
          %s784 = sand.u32 %s201, 1
          %s785 = smul.addr %s784, 2
          %s786 = scalar_lea.vmem [#allocation11], %s785
          %787 = dma.done %s783, 32
        $region76: #{tpu_custom_call.1} parent=63 // pred_fallthru
          _
      $region64: #{tpu_custom_call.1} parent=5 // pred_fallthru
        _
    $region6: #{tpu_custom_call.1} parent=1 // loop_footer
      %s29 = sadd.s32 1, %s25
    $region7: #{tpu_custom_call.1} parent=1 // loop_footer_branch
      %24 = sbr.rel target = $region3
    $region8: #{tpu_custom_call.1} parent=1 // loop_exit
      _
    %788 = vsyncpa [#allocation4], 1
    %s789 = scalar_lea.sflag [#allocation4], 1
    %790 = vsyncpa %s789, 1
    %791 = vsyncpa [#allocation7], 1
    %792 = vsyncpa [#allocation5], 1
    %s793 = scalar_lea.sflag [#allocation5], 1
    %794 = vsyncpa %s793, 1
    %795 = vsyncpa [#allocation10], 1
    %s796 = scalar_lea.sflag [#allocation10], 1
    %797 = vsyncpa %s796, 1

</llo_original>
